<compile_context>
chip_gen: v7x
topology: tpu7x:2x2x1
jax: 0.10.0
libtpu: 0.0.40
codegen_flags: <defaults>
</compile_context>

<pallas_src>
import functools

import jax
import jax.numpy as jnp
from jax.experimental import pallas as pl
from jax.experimental.pallas import tpu as pltpu

LANES = 128  # lane width of a TPU vreg; slabs and head output padded to this


# ---------------------------------------------------------------------------
# Slab layout helper: stack sections along sublanes, each section start
# aligned to the dtype's sublane tile (16 rows for bf16, 8 rows for f32).
# ---------------------------------------------------------------------------
def _pack_rows(sections, align):
    offs, row = {}, 0
    for name, nrows in sections:
        offs[name] = row
        row += -(-nrows // align) * align
    return offs, row


# ---------------------------------------------------------------------------
# Fused Pallas kernel: encoder + pre_mp + all GCN layers + head in one body.
# Two packed input slabs -> one padded output block. No grid.
# ---------------------------------------------------------------------------
def _gnn_fused_kernel(w_ref, s_ref, o_ref, *, num_mp, N, d_in, d_h, woffs, soffs):
    # ---- unpack bf16 weight/activation slab (static, tile-aligned slices) ----
    x      = w_ref[woffs["x"]:woffs["x"] + N, :d_in]            # (N, d_in)  bf16
    w_enc  = w_ref[woffs["enc"]:woffs["enc"] + d_in, :d_h]      # (d_in, d_h) bf16 (BN scale folded)
    w_pre  = w_ref[woffs["pre"]:woffs["pre"] + d_h, :d_h]       # (d_h, d_h)  bf16
    w_head = w_ref[woffs["head"]:woffs["head"] + d_h, :]        # (d_h, 128)  bf16 (zero-padded lanes)

    # ---- unpack f32 slab ----
    adj    = s_ref[:N, :N]                                      # (N, N) f32 A_hat
    sh_enc = s_ref[soffs["enc"]:soffs["enc"] + 1, :d_h]         # (1, d_h) f32 folded BN shift
    b_head = s_ref[soffs["head"]:soffs["head"] + 1, :]          # (1, 128) f32 padded bias

    # 1) FeatureEncoder: node encoder Linear + BatchNorm1d (eval; scale in W, shift here)
    h = jnp.dot(x, w_enc, preferred_element_type=jnp.float32) + sh_enc

    # 2) pre_mp: Linear (no bias) + ReLU
    h = jnp.dot(h.astype(jnp.bfloat16), w_pre, preferred_element_type=jnp.float32)
    h = jnp.maximum(h, 0.0)

    # 3) mp: GCN layers  h = ReLU((A_hat @ h) @ W' + shift)
    #    aggregation stays fully f32 (accuracy); only the weight matmul is bf16.
    for l in range(num_mp):
        w_mp  = w_ref[woffs[f"mp{l}"]:woffs[f"mp{l}"] + d_h, :d_h]
        sh_mp = s_ref[soffs[f"mp{l}"]:soffs[f"mp{l}"] + 1, :d_h]
        agg = jnp.dot(adj, h, preferred_element_type=jnp.float32)
        h = jnp.dot(agg.astype(jnp.bfloat16), w_mp, preferred_element_type=jnp.float32)
        h = jnp.maximum(h + sh_mp, 0.0)

    # 4) post_mp node head: Linear + bias (128-lane padded -> lane-dense store)
    y = jnp.dot(h.astype(jnp.bfloat16), w_head, preferred_element_type=jnp.float32)
    o_ref[...] = y + b_head


# ---------------------------------------------------------------------------
# Host-side wrapper: BN folding, slab packing, single grid-less pallas_call.
# ---------------------------------------------------------------------------
def gnn_forward(x, adj, params, eps=1e-5):
    N, d_in = x.shape
    d_h = params["pre_w"].shape[1]
    d_out = params["head_w"].shape[1]
    num_mp = len(params["mp"])

    # BatchNorm eval-mode running stats (mean=0, var=1); trained running stats
    # would replace rm / rv and fold identically.
    # TODO(synk): training-mode BN (batch statistics) is not representable in
    # this folded eval-mode form.
    rm = jnp.zeros((d_h,), jnp.float32)
    rv = jnp.ones((d_h,), jnp.float32)

    def fold_bn(w, b, gamma, beta):
        # ((x@W + b) - mean) * gamma/sqrt(var+eps) + beta == x @ (W*scale) + shift
        scale = gamma / jnp.sqrt(rv + eps)
        shift = (b - rm) * scale + beta
        return w * scale[None, :], shift

    w_enc, sh_enc = fold_bn(params["enc_w"], params["enc_b"],
                            params["enc_bn_g"], params["enc_bn_b"])
    mp_ws, mp_shs = [], []
    for lp in params["mp"]:
        w, s = fold_bn(lp["w"], lp["b"], lp["bn_g"], lp["bn_b"])
        mp_ws.append(w)
        mp_shs.append(s)

    # ---- bf16 slab: x + all weight matrices, stacked along sublanes ----
    w_sections = ([("x", N), ("enc", d_in), ("pre", d_h)]
                  + [(f"mp{l}", d_h) for l in range(num_mp)]
                  + [("head", d_h)])
    woffs, wrows = _pack_rows(w_sections, align=16)          # 16-row bf16 tiles

    w_slab = jnp.zeros((wrows, LANES), jnp.float32)
    w_slab = w_slab.at[woffs["x"]:woffs["x"] + N, :d_in].set(x)
    w_slab = w_slab.at[woffs["enc"]:woffs["enc"] + d_in, :d_h].set(w_enc)
    w_slab = w_slab.at[woffs["pre"]:woffs["pre"] + d_h, :d_h].set(params["pre_w"])
    for l in range(num_mp):
        w_slab = w_slab.at[woffs[f"mp{l}"]:woffs[f"mp{l}"] + d_h, :d_h].set(mp_ws[l])
    w_slab = w_slab.at[woffs["head"]:woffs["head"] + d_h, :d_out].set(params["head_w"])
    w_slab = w_slab.astype(jnp.bfloat16)

    # ---- f32 slab: A_hat (kept f32 for accuracy), BN shifts, head bias ----
    s_sections = ([("adj", N), ("enc", 1)]
                  + [(f"mp{l}", 1) for l in range(num_mp)]
                  + [("head", 1)])
    soffs, srows = _pack_rows(s_sections, align=8)            # 8-row f32 tiles

    s_slab = jnp.zeros((srows, LANES), jnp.float32)
    s_slab = s_slab.at[:N, :N].set(adj)
    s_slab = s_slab.at[soffs["enc"], :d_h].set(sh_enc)
    for l in range(num_mp):
        s_slab = s_slab.at[soffs[f"mp{l}"], :d_h].set(mp_shs[l])
    s_slab = s_slab.at[soffs["head"], :d_out].set(params["head_b"])

    # Advisory cost estimate (flops of the 4 + 2*num_mp matmuls, slab traffic).
    flops = (2 * N * d_in * d_h + 2 * N * d_h * d_h
             + num_mp * (2 * N * N * d_h + 2 * N * d_h * d_h)
             + 2 * N * d_h * LANES)
    bytes_accessed = wrows * LANES * 2 + srows * LANES * 4 + N * LANES * 4
    cost = pl.CostEstimate(flops=flops, transcendentals=0,
                           bytes_accessed=bytes_accessed)

    kernel = functools.partial(_gnn_fused_kernel, num_mp=num_mp, N=N,
                               d_in=d_in, d_h=d_h, woffs=woffs, soffs=soffs)

    # No grid: single invocation, whole slabs resident in VMEM, no pipeline
    # bookkeeping / double buffering. 2 input DMAs + 1 lane-dense output store.
    out_padded = pl.pallas_call(
        kernel,
        out_shape=jax.ShapeDtypeStruct((N, LANES), jnp.float32),
        cost_estimate=cost,
    )(w_slab, s_slab)

    return out_padded[:, :d_out]


# ---------------------------------------------------------------------------
# Pure-JAX reference (f32) for a sanity check of the fused kernel.
# ---------------------------------------------------------------------------
def gnn_forward_ref(x, adj, params, eps=1e-5):
    d_h = params["pre_w"].shape[1]
    rm = jnp.zeros((d_h,), jnp.float32)
    rv = jnp.ones((d_h,), jnp.float32)

    def bn(y, b, g, beta):
        return ((y + b) - rm) / jnp.sqrt(rv + eps) * g + beta

    h = bn(x @ params["enc_w"], params["enc_b"],
           params["enc_bn_g"], params["enc_bn_b"])
    h = jnp.maximum(h @ params["pre_w"], 0.0)
    for lp in params["mp"]:
        h = jnp.maximum(bn((adj @ h) @ lp["w"], lp["b"],
                           lp["bn_g"], lp["bn_b"]), 0.0)
    return h @ params["head_w"] + params["head_b"]


# ---------------------------------------------------------------------------
# Parameter / graph construction (plain JAX glue)
# ---------------------------------------------------------------------------
def init_params(key, dim_node_in=16, dim_inner=32, dim_out=8, layers_mp=2):
    ks = jax.random.split(key, 16)
    p = {}
    # FeatureEncoder: node encoder Linear(16->32, bias) + BatchNorm1d
    p["enc_w"] = jax.random.normal(ks[0], (dim_node_in, dim_inner), jnp.float32) * 0.1
    p["enc_b"] = jax.random.normal(ks[1], (dim_inner,), jnp.float32) * 0.1
    p["enc_bn_g"] = 1.0 + 0.1 * jax.random.normal(ks[2], (dim_inner,), jnp.float32)
    p["enc_bn_b"] = 0.1 * jax.random.normal(ks[3], (dim_inner,), jnp.float32)
    # pre_mp: 1 x Linear(32->32, no bias) + ReLU
    p["pre_w"] = jax.random.normal(ks[4], (dim_inner, dim_inner), jnp.float32) * 0.1
    # mp: layers_mp GCN layers, each Linear(32->32, bias) + BN + ReLU
    p["mp"] = []
    for l in range(layers_mp):
        kw, kb, kg, kbe = jax.random.split(ks[5 + l], 4)
        p["mp"].append(dict(
            w=jax.random.normal(kw, (dim_inner, dim_inner), jnp.float32) * 0.1,
            b=jax.random.normal(kb, (dim_inner,), jnp.float32) * 0.1,
            bn_g=1.0 + 0.1 * jax.random.normal(kg, (dim_inner,), jnp.float32),
            bn_b=0.1 * jax.random.normal(kbe, (dim_inner,), jnp.float32),
        ))
    # post_mp head: Linear(32->8, bias)
    p["head_w"] = jax.random.normal(ks[10], (dim_inner, dim_out), jnp.float32) * 0.1
    p["head_b"] = jax.random.normal(ks[11], (dim_out,), jnp.float32) * 0.1
    return p


def normalized_adjacency(num_nodes):
    # Deterministic small graph: ring + chords + self-loops, D^-1/2 (A+I) D^-1/2.
    src = jnp.arange(num_nodes)
    dst = (src + 1) % num_nodes
    A = jnp.zeros((num_nodes, num_nodes), jnp.float32)
    A = A.at[src, dst].set(1.0).at[dst, src].set(1.0)
    A = A.at[0, num_nodes // 2].set(1.0).at[num_nodes // 2, 0].set(1.0)
    A = A + jnp.eye(num_nodes, dtype=jnp.float32)
    deg = A.sum(axis=1)
    d_inv_sqrt = 1.0 / jnp.sqrt(deg)
    return A * d_inv_sqrt[:, None] * d_inv_sqrt[None, :]


# ---------------------------------------------------------------------------
if __name__ == "__main__":
    num_nodes = 16
    dim_node_in = 16
    dim_inner = 32
    dim_out = 8

    key = jax.random.PRNGKey(0)
    kx, kp = jax.random.split(key)
    x = jax.random.normal(kx, (num_nodes, dim_node_in), jnp.float32)
    adj = normalized_adjacency(num_nodes)
    params = init_params(kp, dim_node_in, dim_inner, dim_out, layers_mp=2)

    out = gnn_forward(x, adj, params)
    out = jax.block_until_ready(out)

    assert out.shape == (num_nodes, dim_out)
    assert jnp.all(jnp.isfinite(out))

    ref = gnn_forward_ref(x, adj, params)
    assert jnp.allclose(out, ref, atol=1e-1, rtol=1e-1), \
        f"max abs diff {jnp.max(jnp.abs(out - ref))}"

    print("KERNEL_OK")
</pallas_src>

<mosaic_0001>
module attributes {stable_mosaic.version = 11 : i64} {
  func.func @_gnn_fused_kernel(%arg0: memref<160x128xbf16, #tpu.memory_space<vmem>>, %arg1: memref<48x128xf32, #tpu.memory_space<vmem>>, %arg2: memref<16x128xf32, #tpu.memory_space<vmem>>) attributes {dimension_semantics = [], scalar_prefetch = 0 : i64, scratch_operands = 0 : i64, tpu.core_type = #tpu.core_type<tc>} {
    %c0 = arith.constant 0 : index
    %c0_0 = arith.constant 0 : index
    %0 = vector.load %arg0[%c0, %c0_0] : memref<160x128xbf16, #tpu.memory_space<vmem>>, vector<16x16xbf16>
    %c16 = arith.constant 16 : index
    %c0_1 = arith.constant 0 : index
    %1 = vector.load %arg0[%c16, %c0_1] : memref<160x128xbf16, #tpu.memory_space<vmem>>, vector<16x32xbf16>
    %c32 = arith.constant 32 : index
    %c0_2 = arith.constant 0 : index
    %2 = vector.load %arg0[%c32, %c0_2] : memref<160x128xbf16, #tpu.memory_space<vmem>>, vector<32x32xbf16>
    %c128 = arith.constant 128 : index
    %c0_3 = arith.constant 0 : index
    %3 = vector.load %arg0[%c128, %c0_3] : memref<160x128xbf16, #tpu.memory_space<vmem>>, vector<32x128xbf16>
    %c0_4 = arith.constant 0 : index
    %c0_5 = arith.constant 0 : index
    %4 = vector.load %arg1[%c0_4, %c0_5] : memref<48x128xf32, #tpu.memory_space<vmem>>, vector<16x16xf32>
    %c16_6 = arith.constant 16 : index
    %c0_7 = arith.constant 0 : index
    %5 = vector.load %arg1[%c16_6, %c0_7] : memref<48x128xf32, #tpu.memory_space<vmem>>, vector<1x32xf32>
    %c40 = arith.constant 40 : index
    %c0_8 = arith.constant 0 : index
    %6 = vector.load %arg1[%c40, %c0_8] : memref<48x128xf32, #tpu.memory_space<vmem>>, vector<1x128xf32>
    %cst = arith.constant dense<0.000000e+00> : vector<16x32xf32>
    %7 = tpu.matmul %0, %1, %cst {dimension_numbers = #tpu.dot_dimension_numbers<[1], [0], [0], [1], [0, 0, 1, 1], [], []>} : vector<16x16xbf16>, vector<16x32xbf16>, vector<16x32xf32> -> vector<16x32xf32>
    %8 = vector.broadcast %5 : vector<1x32xf32> to vector<16x32xf32>
    %9 = arith.addf %7, %8 : vector<16x32xf32>
    %10 = arith.truncf %9 : vector<16x32xf32> to vector<16x32xbf16>
    %cst_9 = arith.constant dense<0.000000e+00> : vector<16x32xf32>
    %11 = tpu.matmul %10, %2, %cst_9 {dimension_numbers = #tpu.dot_dimension_numbers<[1], [0], [0], [1], [0, 0, 1, 1], [], []>} : vector<16x32xbf16>, vector<32x32xbf16>, vector<16x32xf32> -> vector<16x32xf32>
    %cst_10 = arith.constant 0.000000e+00 : f32
    %12 = vector.broadcast %cst_10 : f32 to vector<16x32xf32>
    %13 = arith.maximumf %11, %12 : vector<16x32xf32>
    %c64 = arith.constant 64 : index
    %c0_11 = arith.constant 0 : index
    %14 = vector.load %arg0[%c64, %c0_11] : memref<160x128xbf16, #tpu.memory_space<vmem>>, vector<32x32xbf16>
    %c24 = arith.constant 24 : index
    %c0_12 = arith.constant 0 : index
    %15 = vector.load %arg1[%c24, %c0_12] : memref<48x128xf32, #tpu.memory_space<vmem>>, vector<1x32xf32>
    %cst_13 = arith.constant dense<0.000000e+00> : vector<16x32xf32>
    %16 = tpu.matmul %4, %13, %cst_13 {dimension_numbers = #tpu.dot_dimension_numbers<[1], [0], [0], [1], [0, 0, 1, 1], [], []>} : vector<16x16xf32>, vector<16x32xf32>, vector<16x32xf32> -> vector<16x32xf32>
    %17 = arith.truncf %16 : vector<16x32xf32> to vector<16x32xbf16>
    %cst_14 = arith.constant dense<0.000000e+00> : vector<16x32xf32>
    %18 = tpu.matmul %17, %14, %cst_14 {dimension_numbers = #tpu.dot_dimension_numbers<[1], [0], [0], [1], [0, 0, 1, 1], [], []>} : vector<16x32xbf16>, vector<32x32xbf16>, vector<16x32xf32> -> vector<16x32xf32>
    %19 = vector.broadcast %15 : vector<1x32xf32> to vector<16x32xf32>
    %20 = arith.addf %18, %19 : vector<16x32xf32>
    %cst_15 = arith.constant 0.000000e+00 : f32
    %21 = vector.broadcast %cst_15 : f32 to vector<16x32xf32>
    %22 = arith.maximumf %20, %21 : vector<16x32xf32>
    %c96 = arith.constant 96 : index
    %c0_16 = arith.constant 0 : index
    %23 = vector.load %arg0[%c96, %c0_16] : memref<160x128xbf16, #tpu.memory_space<vmem>>, vector<32x32xbf16>
    %c32_17 = arith.constant 32 : index
    %c0_18 = arith.constant 0 : index
    %24 = vector.load %arg1[%c32_17, %c0_18] : memref<48x128xf32, #tpu.memory_space<vmem>>, vector<1x32xf32>
    %cst_19 = arith.constant dense<0.000000e+00> : vector<16x32xf32>
    %25 = tpu.matmul %4, %22, %cst_19 {dimension_numbers = #tpu.dot_dimension_numbers<[1], [0], [0], [1], [0, 0, 1, 1], [], []>} : vector<16x16xf32>, vector<16x32xf32>, vector<16x32xf32> -> vector<16x32xf32>
    %26 = arith.truncf %25 : vector<16x32xf32> to vector<16x32xbf16>
    %cst_20 = arith.constant dense<0.000000e+00> : vector<16x32xf32>
    %27 = tpu.matmul %26, %23, %cst_20 {dimension_numbers = #tpu.dot_dimension_numbers<[1], [0], [0], [1], [0, 0, 1, 1], [], []>} : vector<16x32xbf16>, vector<32x32xbf16>, vector<16x32xf32> -> vector<16x32xf32>
    %28 = vector.broadcast %24 : vector<1x32xf32> to vector<16x32xf32>
    %29 = arith.addf %27, %28 : vector<16x32xf32>
    %cst_21 = arith.constant 0.000000e+00 : f32
    %30 = vector.broadcast %cst_21 : f32 to vector<16x32xf32>
    %31 = arith.maximumf %29, %30 : vector<16x32xf32>
    %32 = arith.truncf %31 : vector<16x32xf32> to vector<16x32xbf16>
    %cst_22 = arith.constant dense<0.000000e+00> : vector<16x128xf32>
    %33 = tpu.matmul %32, %3, %cst_22 {dimension_numbers = #tpu.dot_dimension_numbers<[1], [0], [0], [1], [0, 0, 1, 1], [], []>} : vector<16x32xbf16>, vector<32x128xbf16>, vector<16x128xf32> -> vector<16x128xf32>
    %34 = vector.broadcast %6 : vector<1x128xf32> to vector<16x128xf32>
    %35 = arith.addf %33, %34 : vector<16x128xf32>
    %c0_23 = arith.constant 0 : index
    %c0_24 = arith.constant 0 : index
    %36 = vector.load %arg2[%c0_23, %c0_24] : memref<16x128xf32, #tpu.memory_space<vmem>>, vector<16x128xf32>
    tpu.vector_store %arg2[%c0_23, %c0_24], %35 {strides = array<i32>} : memref<16x128xf32, #tpu.memory_space<vmem>>, vector<16x128xf32>,
    return
  }
}

</mosaic_0001>

<llo_original>
// kernel: tpu_custom_call.1
$region0: #{tpu_custom_call.1}
  #allocation0 [shape = 'u32[]', space=smem, size = 0x4, offset = 0x4, fixed_abs, tag = 'smem constant byte address 0x4 - core index']
  #allocation1 [shape = 'u32[144,128]{1,0:T(1,128)}', space=vmem, size = 0x12000, scoped, tag = 'internal scratch']
  %s0 = inlined_call_operand.hbm [shape: bf16[160,128], index: 0, kind: input, shape index: {}]
  %s1 = inlined_call_operand.hbm [shape: f32[48,128], index: 1, kind: input, shape index: {}]
  %s2 = inlined_call_operand.hbm [shape: f32[16,128], index: 2, kind: output, shape index: {}]
  %s3 = sld [smem:[#allocation0]]
  $region26: #{tpu_custom_call.1} parent=0
    _
  %s5 = ssub.s32 1, %s3
  %s6 = scalar_select 0, %s5, %s3
  $region1: #{tpu_custom_call.1} parent=0
    #allocation2 [shape = 'u8[40960]{0}', space=vmem, size = 0xa000, scoped, tag = 'input window, operand 0, single buffered']
    #allocation3 [shape = 's32[1]{0}', space=sflag, size = 0x4, scoped, tag = 'scoped memory for tpu_custom_call.1']
    #allocation4 [shape = 's32[1]{0}', space=sflag, size = 0x4, scoped, tag = 'scoped memory for tpu_custom_call.1']
    #allocation5 [shape = 'u8[24576]{0}', space=vmem, size = 0x6000, scoped, tag = 'input window, operand 1, single buffered']
    #allocation6 [shape = 's32[1]{0}', space=sflag, size = 0x4, scoped, tag = 'scoped memory for tpu_custom_call.1']
    #allocation7 [shape = 'u8[8192]{0}', space=vmem, size = 0x2000, scoped, tag = 'output window, operand 0, single buffered']
    %7 = vsyncpa [#allocation3], 0
    %8 = vsyncpa [#allocation6], 0
    %9 = vsyncpa [#allocation4], 0
    // Predicated region
    $region2: #{tpu_custom_call.1} parent=1 // pred_check
      _
    $region3: #{tpu_custom_call.1} parent=1 // pred_check_branch
      %11 = sbr.rel (0) target = $region5
    $region4: #{tpu_custom_call.1} parent=1 // pred_region
      %s13 = ssub.s32 1280, 1280
      %14 = vsyncadd [#allocation3], %s13
      %s15 = sshll.u32 [#allocation2], 4
      %s16 = int_to_ptr.vmem [resolvable:$true] %s15
      %21 = dma.hbm_to_vmem [thread:$0]  %s0, 1280, %s16, [#allocation3], 64, 64, 4
    $region5: #{tpu_custom_call.1} parent=1 // pred_fallthru
      _
    // Predicated region
    $region6: #{tpu_custom_call.1} parent=1 // pred_check
      _
    $region7: #{tpu_custom_call.1} parent=1 // pred_check_branch
      %23 = sbr.rel (0) target = $region9
    $region8: #{tpu_custom_call.1} parent=1 // pred_region
      %s25 = ssub.s32 768, 768
      %26 = vsyncadd [#allocation6], %s25
      %s27 = sshll.u32 [#allocation5], 4
      %s28 = int_to_ptr.vmem [resolvable:$true] %s27
      %33 = dma.hbm_to_vmem [thread:$0]  %s1, 768, %s28, [#allocation6], 128, 128, 8
    $region9: #{tpu_custom_call.1} parent=1 // pred_fallthru
      _
    // Predicated region
    $region10: #{tpu_custom_call.1} parent=1 // pred_check
      _
    $region11: #{tpu_custom_call.1} parent=1 // pred_check_branch
      %35 = sbr.rel (0) target = $region13
    $region12: #{tpu_custom_call.1} parent=1 // pred_region
      %36 = dma.done [#allocation3], 1280
    $region13: #{tpu_custom_call.1} parent=1 // pred_fallthru
      _
    // Predicated region
    $region14: #{tpu_custom_call.1} parent=1 // pred_check
      _
    $region15: #{tpu_custom_call.1} parent=1 // pred_check_branch
      %38 = sbr.rel (0) target = $region17
    $region16: #{tpu_custom_call.1} parent=1 // pred_region
      %39 = dma.done [#allocation6], 768
    $region17: #{tpu_custom_call.1} parent=1 // pred_fallthru
      _
    %v41 = vld [vmem:[#allocation2] sm:$0xf]
    %v42 = vld [vmem:[#allocation2 + $0x4] sm:$0xf]
    %v43 = vld [vmem:[#allocation2 + $0x8] sm:$0xf]
    %v44 = vld [vmem:[#allocation2 + $0xc] sm:$0xf]
    %v45 = vld [vmem:[#allocation2 + $0x10] sm:$0xf]
    %v46 = vld [vmem:[#allocation2 + $0x14] sm:$0xf]
    %v47 = vld [vmem:[#allocation2 + $0x18] sm:$0xf]
    %v48 = vld [vmem:[#allocation2 + $0x1c] sm:$0xf]
    %v49 = vld [vmem:[#allocation2 + $0x40] sm:$0xf]
    %v50 = vld [vmem:[#allocation2 + $0x44] sm:$0xf]
    %v51 = vld [vmem:[#allocation2 + $0x48] sm:$0xf]
    %v52 = vld [vmem:[#allocation2 + $0x4c] sm:$0xf]
    %v53 = vld [vmem:[#allocation5] sm:$0xff]
    %v54 = vld [vmem:[#allocation5 + $0x8] sm:$0xff]
    %v55 = vld [vmem:[#allocation5 + $0x10] sm:$0x1]
    %v56 = vld [vmem:[#allocation5 + $0x28] sm:$0x1]
    %v57 = vlaneseq
    %v58 = vshrl.u32 %v57, 7
    %v59 = vsub.s32 0, %v58
    %v60 = vrot.slane %v55, %v59
    %v63 = vunpack.c.l.b16 %v41
    %v64 = vunpack.c.l.b16 %v42
    %v65 = vpack.c.b16 %v64, %v63
    %v68 = vunpack.c.l.b16 %v43
    %v69 = vunpack.c.l.b16 %v44
    %v70 = vpack.c.b16 %v69, %v68
    %vm72 = vcmask 130048
    %v74 = vsel %vm72, %v65, 0
    %76 = vmatprep.subr.bf16.mxu0 0
    %77 = vmatpush1.bf16.msra.mxu0 %v70
    %78 = vmatprep.subr.bf16.mxu0 0
    %79 = vmatpush1.bf16.msra.mxu0 0
    %80 = vmatprep.subr.bf16.mxu0 0
    %81 = vmatpush1.bf16.msra.mxu0 0
    %82 = vmatprep.subr.bf16.mxu0 0
    %83 = vmatpush1.bf16.msra.mxu0 0
    %84 = vmatprep.subr.bf16.mxu0 0
    %85 = vmatpush1.bf16.msra.mxu0 0
    %86 = vmatprep.subr.bf16.mxu0 0
    %87 = vmatpush1.bf16.msra.mxu0 0
    %88 = vmatprep.subr.bf16.mxu0 0
    %89 = vmatpush1.bf16.msra.mxu0 0
    %90 = vmatprep.subr.bf16.mxu0 0
    %91 = vmatpush1.bf16.msra.mxu0 0
    %92 = vmatprep.subr.bf16.mxu0 0
    %93 = vmatpush1.bf16.msra.mxu0 0
    %94 = vmatprep.subr.bf16.mxu0 0
    %95 = vmatpush1.bf16.msra.mxu0 0
    %96 = vmatprep.subr.bf16.mxu0 0
    %97 = vmatpush1.bf16.msra.mxu0 0
    %98 = vmatprep.subr.bf16.mxu0 0
    %99 = vmatpush1.bf16.msra.mxu0 0
    %100 = vmatprep.subr.bf16.mxu0 0
    %101 = vmatpush1.bf16.msra.mxu0 0
    %102 = vmatprep.subr.bf16.mxu0 0
    %103 = vmatpush1.bf16.msra.mxu0 0
    %104 = vmatprep.subr.bf16.mxu0 0
    %105 = vmatpush1.bf16.msra.mxu0 0
    %106 = vmatprep.subr.bf16.mxu0 0
    %107 = vmatpush1.bf16.msra.mxu0 0
    %108 = vmatprep.mubr.bf16.mxu0 0
    %109 = vmatmul.mubr.bf16.gmra.mrb[0].mxu0 %v74
    %v110 = vpop.f32.mrb[0].mxu0
    %v111 = vadd.f32 %v60, %v110
    %v112 = vpop.f32.mrb[0].mxu0
    %v113 = vpop.f32.mrb[0].mxu0
    %v114 = vadd.f32 %v60, %v113
    %v115 = vpop.f32.mrb[0].mxu0
    %116 = vdwg.mxu0
    %v117 = vpack.c.bf16 %v114, %v111
    %v122 = vunpack.c.l.b16 %v45
    %v123 = vunpack.c.l.b16 %v46
    %v124 = vunpack.c.l.b16 %v47
    %v125 = vunpack.c.l.b16 %v48
    %v126 = vpack.c.b16 %v123, %v122
    %v127 = vpack.c.b16 %v125, %v124
    %vm130 = vcmask 261120
    %v132 = vsel %vm130, %v117, 0
    %134 = vmatprep.subr.bf16.mxu0 0
    %135 = vmatpush1.bf16.msra.mxu0 %v126
    %136 = vmatprep.subr.bf16.mxu0 0
    %137 = vmatpush1.bf16.msra.mxu0 %v127
    %138 = vmatprep.subr.bf16.mxu0 0
    %139 = vmatpush1.bf16.msra.mxu0 0
    %140 = vmatprep.subr.bf16.mxu0 0
    %141 = vmatpush1.bf16.msra.mxu0 0
    %142 = vmatprep.subr.bf16.mxu0 0
    %143 = vmatpush1.bf16.msra.mxu0 0
    %144 = vmatprep.subr.bf16.mxu0 0
    %145 = vmatpush1.bf16.msra.mxu0 0
    %146 = vmatprep.subr.bf16.mxu0 0
    %147 = vmatpush1.bf16.msra.mxu0 0
    %148 = vmatprep.subr.bf16.mxu0 0
    %149 = vmatpush1.bf16.msra.mxu0 0
    %150 = vmatprep.subr.bf16.mxu0 0
    %151 = vmatpush1.bf16.msra.mxu0 0
    %152 = vmatprep.subr.bf16.mxu0 0
    %153 = vmatpush1.bf16.msra.mxu0 0
    %154 = vmatprep.subr.bf16.mxu0 0
    %155 = vmatpush1.bf16.msra.mxu0 0
    %156 = vmatprep.subr.bf16.mxu0 0
    %157 = vmatpush1.bf16.msra.mxu0 0
    %158 = vmatprep.subr.bf16.mxu0 0
    %159 = vmatpush1.bf16.msra.mxu0 0
    %160 = vmatprep.subr.bf16.mxu0 0
    %161 = vmatpush1.bf16.msra.mxu0 0
    %162 = vmatprep.subr.bf16.mxu0 0
    %163 = vmatpush1.bf16.msra.mxu0 0
    %164 = vmatprep.subr.bf16.mxu0 0
    %165 = vmatpush1.bf16.msra.mxu0 0
    %166 = vmatprep.mubr.bf16.mxu0 0
    %167 = vmatmul.mubr.bf16.gmra.mrb[0].mxu0 %v132
    %v168 = vpop.f32.mrb[0].mxu0
    %v169 = vadd.f32 0.0, %v168
    %v170 = vpop.f32.mrb[0].mxu0
    %v171 = vpop.f32.mrb[0].mxu0
    %v172 = vadd.f32 0.0, %v171
    %v173 = vpop.f32.mrb[0].mxu0
    %174 = vdwg.mxu0
    %v175 = vmax.f32 %v169, 0.0
    %v176 = vmax.f32 %v172, 0.0
    %v177 = vld [vmem:[#allocation2 + $0x20] sm:$0xf]
    %v178 = vld [vmem:[#allocation2 + $0x24] sm:$0xf]
    %v179 = vld [vmem:[#allocation2 + $0x28] sm:$0xf]
    %v180 = vld [vmem:[#allocation2 + $0x2c] sm:$0xf]
    %v181 = vld [vmem:[#allocation5 + $0x18] sm:$0x1]
    %v183 = vsel %vm72, %v53, 0
    %v186 = vsel %vm72, %v54, 0
    %188 = vmatprep.subr.mxu0 0.0
    %189 = vmatpush1.msra.mxu0 %v175
    %190 = vmatprep.subr.mxu0 0.0
    %191 = vmatpush1.msra.mxu0 %v176
    %192 = vmatprep.subr.mxu0 0.0
    %193 = vmatpush1.msra.mxu0 0.0
    %194 = vmatprep.subr.mxu0 0.0
    %195 = vmatpush1.msra.mxu0 0.0
    %196 = vmatprep.subr.mxu0 0.0
    %197 = vmatpush1.msra.mxu0 0.0
    %198 = vmatprep.subr.mxu0 0.0
    %199 = vmatpush1.msra.mxu0 0.0
    %200 = vmatprep.subr.mxu0 0.0
    %201 = vmatpush1.msra.mxu0 0.0
    %202 = vmatprep.subr.mxu0 0.0
    %203 = vmatpush1.msra.mxu0 0.0
    %204 = vmatprep.subr.mxu0 0.0
    %205 = vmatpush1.msra.mxu0 0.0
    %206 = vmatprep.subr.mxu0 0.0
    %207 = vmatpush1.msra.mxu0 0.0
    %208 = vmatprep.subr.mxu0 0.0
    %209 = vmatpush1.msra.mxu0 0.0
    %210 = vmatprep.subr.mxu0 0.0
    %211 = vmatpush1.msra.mxu0 0.0
    %212 = vmatprep.subr.mxu0 0.0
    %213 = vmatpush1.msra.mxu0 0.0
    %214 = vmatprep.subr.mxu0 0.0
    %215 = vmatpush1.msra.mxu0 0.0
    %216 = vmatprep.subr.mxu0 0.0
    %217 = vmatpush1.msra.mxu0 0.0
    %218 = vmatprep.subr.mxu0 0.0
    %219 = vmatpush1.msra.mxu0 0.0
    %220 = vmatprep.subr.mxu0 0.0
    %221 = vmatpush1.msra.mxu0 0.0
    %222 = vmatprep.subr.mxu0 0.0
    %223 = vmatpush1.msra.mxu0 0.0
    %224 = vmatprep.subr.mxu0 0.0
    %225 = vmatpush1.msra.mxu0 0.0
    %226 = vmatprep.subr.mxu0 0.0
    %227 = vmatpush1.msra.mxu0 0.0
    %228 = vmatprep.subr.mxu0 0.0
    %229 = vmatpush1.msra.mxu0 0.0
    %230 = vmatprep.subr.mxu0 0.0
    %231 = vmatpush1.msra.mxu0 0.0
    %232 = vmatprep.subr.mxu0 0.0
    %233 = vmatpush1.msra.mxu0 0.0
    %234 = vmatprep.subr.mxu0 0.0
    %235 = vmatpush1.msra.mxu0 0.0
    %236 = vmatprep.subr.mxu0 0.0
    %237 = vmatpush1.msra.mxu0 0.0
    %238 = vmatprep.subr.mxu0 0.0
    %239 = vmatpush1.msra.mxu0 0.0
    %240 = vmatprep.subr.mxu0 0.0
    %241 = vmatpush1.msra.mxu0 0.0
    %242 = vmatprep.subr.mxu0 0.0
    %243 = vmatpush1.msra.mxu0 0.0
    %244 = vmatprep.subr.mxu0 0.0
    %245 = vmatpush1.msra.mxu0 0.0
    %246 = vmatprep.subr.mxu0 0.0
    %247 = vmatpush1.msra.mxu0 0.0
    %248 = vmatprep.subr.mxu0 0.0
    %249 = vmatpush1.msra.mxu0 0.0
    %250 = vmatprep.subr.mxu0 0.0
    %251 = vmatpush1.msra.mxu0 0.0
    %252 = vmatprep.mubr.f32.mxu0 0.0
    %253 = vmatmul.mubr.f32.gmra.mrb[0].mxu0 %v183
    %v254 = vpop.f32.mrb[0].mxu0
    %v255 = vadd.f32 0.0, %v254
    %v256 = vpop.f32.mrb[0].mxu0
    %257 = vmatprep.mubr.f32.mxu0 0.0
    %258 = vmatmul.mubr.f32.gmra.mrb[0].mxu0 %v186
    %v259 = vpop.f32.mrb[0].mxu0
    %v260 = vadd.f32 0.0, %v259
    %v261 = vpop.f32.mrb[0].mxu0
    %262 = vdwg.mxu0
    %v263 = vpack.c.bf16 %v260, %v255
    %v264 = vlaneseq
    %v265 = vshrl.u32 %v264, 7
    %v266 = vsub.s32 0, %v265
    %v267 = vrot.slane %v181, %v266
    %v272 = vunpack.c.l.b16 %v177
    %v273 = vunpack.c.l.b16 %v178
    %v274 = vunpack.c.l.b16 %v179
    %v275 = vunpack.c.l.b16 %v180
    %v276 = vpack.c.b16 %v273, %v272
    %v277 = vpack.c.b16 %v275, %v274
    %v281 = vsel %vm130, %v263, 0
    %283 = vmatprep.subr.bf16.mxu0 0
    %284 = vmatpush1.bf16.msra.mxu0 %v276
    %285 = vmatprep.subr.bf16.mxu0 0
    %286 = vmatpush1.bf16.msra.mxu0 %v277
    %287 = vmatprep.subr.bf16.mxu0 0
    %288 = vmatpush1.bf16.msra.mxu0 0
    %289 = vmatprep.subr.bf16.mxu0 0
    %290 = vmatpush1.bf16.msra.mxu0 0
    %291 = vmatprep.subr.bf16.mxu0 0
    %292 = vmatpush1.bf16.msra.mxu0 0
    %293 = vmatprep.subr.bf16.mxu0 0
    %294 = vmatpush1.bf16.msra.mxu0 0
    %295 = vmatprep.subr.bf16.mxu0 0
    %296 = vmatpush1.bf16.msra.mxu0 0
    %297 = vmatprep.subr.bf16.mxu0 0
    %298 = vmatpush1.bf16.msra.mxu0 0
    %299 = vmatprep.subr.bf16.mxu0 0
    %300 = vmatpush1.bf16.msra.mxu0 0
    %301 = vmatprep.subr.bf16.mxu0 0
    %302 = vmatpush1.bf16.msra.mxu0 0
    %303 = vmatprep.subr.bf16.mxu0 0
    %304 = vmatpush1.bf16.msra.mxu0 0
    %305 = vmatprep.subr.bf16.mxu0 0
    %306 = vmatpush1.bf16.msra.mxu0 0
    %307 = vmatprep.subr.bf16.mxu0 0
    %308 = vmatpush1.bf16.msra.mxu0 0
    %309 = vmatprep.subr.bf16.mxu0 0
    %310 = vmatpush1.bf16.msra.mxu0 0
    %311 = vmatprep.subr.bf16.mxu0 0
    %312 = vmatpush1.bf16.msra.mxu0 0
    %313 = vmatprep.subr.bf16.mxu0 0
    %314 = vmatpush1.bf16.msra.mxu0 0
    %315 = vmatprep.mubr.bf16.mxu0 0
    %316 = vmatmul.mubr.bf16.gmra.mrb[0].mxu0 %v281
    %v317 = vpop.f32.mrb[0].mxu0
    %v318 = vadd.f32 %v267, %v317
    %v319 = vpop.f32.mrb[0].mxu0
    %v320 = vpop.f32.mrb[0].mxu0
    %v321 = vadd.f32 %v267, %v320
    %v322 = vpop.f32.mrb[0].mxu0
    %323 = vdwg.mxu0
    %v324 = vmax.f32 %v318, 0.0
    %v325 = vmax.f32 %v321, 0.0
    %v326 = vld [vmem:[#allocation2 + $0x30] sm:$0xf]
    %v327 = vld [vmem:[#allocation2 + $0x34] sm:$0xf]
    %v328 = vld [vmem:[#allocation2 + $0x38] sm:$0xf]
    %v329 = vld [vmem:[#allocation2 + $0x3c] sm:$0xf]
    %v330 = vld [vmem:[#allocation5 + $0x20] sm:$0x1]
    %331 = vmatprep.subr.mxu0 0.0
    %332 = vmatpush1.msra.mxu0 %v324
    %333 = vmatprep.subr.mxu0 0.0
    %334 = vmatpush1.msra.mxu0 %v325
    %335 = vmatprep.subr.mxu0 0.0
    %336 = vmatpush1.msra.mxu0 0.0
    %337 = vmatprep.subr.mxu0 0.0
    %338 = vmatpush1.msra.mxu0 0.0
    %339 = vmatprep.subr.mxu0 0.0
    %340 = vmatpush1.msra.mxu0 0.0
    %341 = vmatprep.subr.mxu0 0.0
    %342 = vmatpush1.msra.mxu0 0.0
    %343 = vmatprep.subr.mxu0 0.0
    %344 = vmatpush1.msra.mxu0 0.0
    %345 = vmatprep.subr.mxu0 0.0
    %346 = vmatpush1.msra.mxu0 0.0
    %347 = vmatprep.subr.mxu0 0.0
    %348 = vmatpush1.msra.mxu0 0.0
    %349 = vmatprep.subr.mxu0 0.0
    %350 = vmatpush1.msra.mxu0 0.0
    %351 = vmatprep.subr.mxu0 0.0
    %352 = vmatpush1.msra.mxu0 0.0
    %353 = vmatprep.subr.mxu0 0.0
    %354 = vmatpush1.msra.mxu0 0.0
    %355 = vmatprep.subr.mxu0 0.0
    %356 = vmatpush1.msra.mxu0 0.0
    %357 = vmatprep.subr.mxu0 0.0
    %358 = vmatpush1.msra.mxu0 0.0
    %359 = vmatprep.subr.mxu0 0.0
    %360 = vmatpush1.msra.mxu0 0.0
    %361 = vmatprep.subr.mxu0 0.0
    %362 = vmatpush1.msra.mxu0 0.0
    %363 = vmatprep.subr.mxu0 0.0
    %364 = vmatpush1.msra.mxu0 0.0
    %365 = vmatprep.subr.mxu0 0.0
    %366 = vmatpush1.msra.mxu0 0.0
    %367 = vmatprep.subr.mxu0 0.0
    %368 = vmatpush1.msra.mxu0 0.0
    %369 = vmatprep.subr.mxu0 0.0
    %370 = vmatpush1.msra.mxu0 0.0
    %371 = vmatprep.subr.mxu0 0.0
    %372 = vmatpush1.msra.mxu0 0.0
    %373 = vmatprep.subr.mxu0 0.0
    %374 = vmatpush1.msra.mxu0 0.0
    %375 = vmatprep.subr.mxu0 0.0
    %376 = vmatpush1.msra.mxu0 0.0
    %377 = vmatprep.subr.mxu0 0.0
    %378 = vmatpush1.msra.mxu0 0.0
    %379 = vmatprep.subr.mxu0 0.0
    %380 = vmatpush1.msra.mxu0 0.0
    %381 = vmatprep.subr.mxu0 0.0
    %382 = vmatpush1.msra.mxu0 0.0
    %383 = vmatprep.subr.mxu0 0.0
    %384 = vmatpush1.msra.mxu0 0.0
    %385 = vmatprep.subr.mxu0 0.0
    %386 = vmatpush1.msra.mxu0 0.0
    %387 = vmatprep.subr.mxu0 0.0
    %388 = vmatpush1.msra.mxu0 0.0
    %389 = vmatprep.subr.mxu0 0.0
    %390 = vmatpush1.msra.mxu0 0.0
    %391 = vmatprep.subr.mxu0 0.0
    %392 = vmatpush1.msra.mxu0 0.0
    %393 = vmatprep.subr.mxu0 0.0
    %394 = vmatpush1.msra.mxu0 0.0
    %395 = vmatprep.mubr.f32.mxu0 0.0
    %396 = vmatmul.mubr.f32.gmra.mrb[0].mxu0 %v183
    %v397 = vpop.f32.mrb[0].mxu0
    %v398 = vadd.f32 0.0, %v397
    %v399 = vpop.f32.mrb[0].mxu0
    %400 = vmatprep.mubr.f32.mxu0 0.0
    %401 = vmatmul.mubr.f32.gmra.mrb[0].mxu0 %v186
    %v402 = vpop.f32.mrb[0].mxu0
    %v403 = vadd.f32 0.0, %v402
    %v404 = vpop.f32.mrb[0].mxu0
    %405 = vdwg.mxu0
    %v406 = vpack.c.bf16 %v403, %v398
    %v407 = vlaneseq
    %v408 = vshrl.u32 %v407, 7
    %v409 = vsub.s32 0, %v408
    %v410 = vrot.slane %v330, %v409
    %v415 = vunpack.c.l.b16 %v326
    %v416 = vunpack.c.l.b16 %v327
    %v417 = vunpack.c.l.b16 %v328
    %v418 = vunpack.c.l.b16 %v329
    %v419 = vpack.c.b16 %v416, %v415
    %v420 = vpack.c.b16 %v418, %v417
    %v424 = vsel %vm130, %v406, 0
    %426 = vmatprep.subr.bf16.mxu0 0
    %427 = vmatpush1.bf16.msra.mxu0 %v419
    %428 = vmatprep.subr.bf16.mxu0 0
    %429 = vmatpush1.bf16.msra.mxu0 %v420
    %430 = vmatprep.subr.bf16.mxu0 0
    %431 = vmatpush1.bf16.msra.mxu0 0
    %432 = vmatprep.subr.bf16.mxu0 0
    %433 = vmatpush1.bf16.msra.mxu0 0
    %434 = vmatprep.subr.bf16.mxu0 0
    %435 = vmatpush1.bf16.msra.mxu0 0
    %436 = vmatprep.subr.bf16.mxu0 0
    %437 = vmatpush1.bf16.msra.mxu0 0
    %438 = vmatprep.subr.bf16.mxu0 0
    %439 = vmatpush1.bf16.msra.mxu0 0
    %440 = vmatprep.subr.bf16.mxu0 0
    %441 = vmatpush1.bf16.msra.mxu0 0
    %442 = vmatprep.subr.bf16.mxu0 0
    %443 = vmatpush1.bf16.msra.mxu0 0
    %444 = vmatprep.subr.bf16.mxu0 0
    %445 = vmatpush1.bf16.msra.mxu0 0
    %446 = vmatprep.subr.bf16.mxu0 0
    %447 = vmatpush1.bf16.msra.mxu0 0
    %448 = vmatprep.subr.bf16.mxu0 0
    %449 = vmatpush1.bf16.msra.mxu0 0
    %450 = vmatprep.subr.bf16.mxu0 0
    %451 = vmatpush1.bf16.msra.mxu0 0
    %452 = vmatprep.subr.bf16.mxu0 0
    %453 = vmatpush1.bf16.msra.mxu0 0
    %454 = vmatprep.subr.bf16.mxu0 0
    %455 = vmatpush1.bf16.msra.mxu0 0
    %456 = vmatprep.subr.bf16.mxu0 0
    %457 = vmatpush1.bf16.msra.mxu0 0
    %458 = vmatprep.mubr.bf16.mxu0 0
    %459 = vmatmul.mubr.bf16.gmra.mrb[0].mxu0 %v424
    %v460 = vpop.f32.mrb[0].mxu0
    %v461 = vadd.f32 %v410, %v460
    %v462 = vpop.f32.mrb[0].mxu0
    %v463 = vpop.f32.mrb[0].mxu0
    %v464 = vadd.f32 %v410, %v463
    %v465 = vpop.f32.mrb[0].mxu0
    %466 = vdwg.mxu0
    %v467 = vmax.f32 %v461, 0.0
    %v468 = vmax.f32 %v464, 0.0
    %v469 = vpack.c.bf16 %v468, %v467
    %v470 = vlaneseq
    %v471 = vshrl.u32 %v470, 7
    %v472 = vsub.s32 0, %v471
    %v473 = vrot.slane %v56, %v472
    %v478 = vunpack.c.l.b16 %v49
    %v479 = vunpack.c.l.b16 %v50
    %v480 = vunpack.c.l.b16 %v51
    %v481 = vunpack.c.l.b16 %v52
    %v482 = vpack.c.b16 %v479, %v478
    %v483 = vpack.c.b16 %v481, %v480
    %v487 = vsel %vm130, %v469, 0
    %489 = vmatprep.subr.bf16.mxu0 0
    %490 = vmatpush1.bf16.msra.mxu0 %v482
    %491 = vmatprep.subr.bf16.mxu0 0
    %492 = vmatpush1.bf16.msra.mxu0 %v483
    %493 = vmatprep.subr.bf16.mxu0 0
    %494 = vmatpush1.bf16.msra.mxu0 0
    %495 = vmatprep.subr.bf16.mxu0 0
    %496 = vmatpush1.bf16.msra.mxu0 0
    %497 = vmatprep.subr.bf16.mxu0 0
    %498 = vmatpush1.bf16.msra.mxu0 0
    %499 = vmatprep.subr.bf16.mxu0 0
    %500 = vmatpush1.bf16.msra.mxu0 0
    %501 = vmatprep.subr.bf16.mxu0 0
    %502 = vmatpush1.bf16.msra.mxu0 0
    %503 = vmatprep.subr.bf16.mxu0 0
    %504 = vmatpush1.bf16.msra.mxu0 0
    %505 = vmatprep.subr.bf16.mxu0 0
    %506 = vmatpush1.bf16.msra.mxu0 0
    %507 = vmatprep.subr.bf16.mxu0 0
    %508 = vmatpush1.bf16.msra.mxu0 0
    %509 = vmatprep.subr.bf16.mxu0 0
    %510 = vmatpush1.bf16.msra.mxu0 0
    %511 = vmatprep.subr.bf16.mxu0 0
    %512 = vmatpush1.bf16.msra.mxu0 0
    %513 = vmatprep.subr.bf16.mxu0 0
    %514 = vmatpush1.bf16.msra.mxu0 0
    %515 = vmatprep.subr.bf16.mxu0 0
    %516 = vmatpush1.bf16.msra.mxu0 0
    %517 = vmatprep.subr.bf16.mxu0 0
    %518 = vmatpush1.bf16.msra.mxu0 0
    %519 = vmatprep.subr.bf16.mxu0 0
    %520 = vmatpush1.bf16.msra.mxu0 0
    %521 = vmatprep.mubr.bf16.mxu0 0
    %522 = vmatmul.mubr.bf16.gmra.mrb[0].mxu0 %v487
    %v523 = vpop.f32.mrb[0].mxu0
    %v524 = vadd.f32 %v473, %v523
    %v525 = vpop.f32.mrb[0].mxu0
    %v526 = vpop.f32.mrb[0].mxu0
    %v527 = vadd.f32 %v473, %v526
    %v528 = vpop.f32.mrb[0].mxu0
    %529 = vdwg.mxu0
    %530 = vst [vmem:[#allocation7] sm:$0xff] %v524
    %531 = vst [vmem:[#allocation7 + $0x8] sm:$0xff] %v527
    // Predicated region
    $region18: #{tpu_custom_call.1} parent=1 // pred_check
      _
    $region19: #{tpu_custom_call.1} parent=1 // pred_check_branch
      %533 = sbr.rel (0) target = $region21
    $region20: #{tpu_custom_call.1} parent=1 // pred_region
      %s535 = ssub.s32 256, 256
      %536 = vsyncadd [#allocation4], %s535
      %s537 = sshll.u32 [#allocation7], 4
      %s538 = int_to_ptr.vmem [resolvable:$true] %s537
      %543 = dma.vmem_to_hbm [thread:$0]  %s538, 256, %s2, [#allocation4], 128, 128, 8
    $region21: #{tpu_custom_call.1} parent=1 // pred_fallthru
      _
    // Predicated region
    $region22: #{tpu_custom_call.1} parent=1 // pred_check
      _
    $region23: #{tpu_custom_call.1} parent=1 // pred_check_branch
      %545 = sbr.rel (0) target = $region25
    $region24: #{tpu_custom_call.1} parent=1 // pred_region
      %546 = dma.done [#allocation4], 256
    $region25: #{tpu_custom_call.1} parent=1 // pred_fallthru
      _
    %547 = vsyncpa [#allocation3], 1
    %548 = vsyncpa [#allocation6], 1
    %549 = vsyncpa [#allocation4], 1

</llo_original>
